<compile_context>
chip_gen: v7x
topology: tpu7x:2x2x1
jax: 0.10.0
libtpu: 0.0.40
codegen_flags: <defaults>
</compile_context>

<pallas_src>
import functools

import jax
import jax.numpy as jnp
from jax import lax
from jax.experimental import pallas as pl
from jax.experimental.pallas import tpu as pltpu

LAYER_NORM_EPS = 1e-6
MASK_FILL = -1e9


# ---------------------------------------------------------------------------
# small in-kernel helpers
# ---------------------------------------------------------------------------
def _layer_norm(x, gamma, beta, eps=LAYER_NORM_EPS):
    mean = jnp.mean(x, axis=-1, keepdims=True)
    var = jnp.mean((x - mean) ** 2, axis=-1, keepdims=True)
    return (x - mean) * lax.rsqrt(var + eps) * gamma + beta


def _roll_right(x, shift):
    """np.roll along the last (lane) axis, static shift: out[..., j] = x[..., (j - shift) % n]."""
    n = x.shape[-1]
    s = shift % n
    if s == 0:
        return x
    return jnp.concatenate(
        [lax.slice_in_dim(x, n - s, n, axis=-1),
         lax.slice_in_dim(x, 0, n - s, axis=-1)], axis=-1)


def _rel_shift_band(bd, q_len):
    """In-kernel Transformer-XL _rel_shift, valid for r_len == 2 * q_len.

    out[i, j] = bd[i, q_len - i + j]  for 0 <= i, j < q_len.
    Row i needs a circular right-roll by (q_len + i): apply the constant q_len
    roll once, then the per-row +i via its binary decomposition with
    row-masked selects (only constant-shift rolls -> safe lowering).
    """
    rows = lax.broadcasted_iota(jnp.int32, bd.shape, 0)
    y = _roll_right(bd, q_len)
    step = 1
    while step < q_len:
        y = jnp.where((rows & step) != 0, _roll_right(y, step), y)
        step *= 2
    return y[:, :q_len]


# ---------------------------------------------------------------------------
# Kernel 1: plain LayerNorm (initial norm of the TransformerXL stack)
# ---------------------------------------------------------------------------
def _layer_norm_kernel(x_ref, g_ref, b_ref, o_ref):
    x = x_ref[0].astype(jnp.float32)
    o_ref[0] = _layer_norm(x, g_ref[...], b_ref[...]).astype(o_ref.dtype)


def layer_norm_pallas(x, g, b):
    B, T, D = x.shape
    return pl.pallas_call(
        _layer_norm_kernel,
        grid=(B,),
        in_specs=[pl.BlockSpec((1, T, D), lambda i: (i, 0, 0)),
                  pl.BlockSpec((1, D), lambda i: (0, 0)),
                  pl.BlockSpec((1, D), lambda i: (0, 0))],
        out_specs=pl.BlockSpec((1, T, D), lambda i: (i, 0, 0)),
        out_shape=jax.ShapeDtypeStruct((B, T, D), jnp.float32),
        compiler_params=pltpu.CompilerParams(dimension_semantics=("parallel",)),
    )(x, g, b)


# ---------------------------------------------------------------------------
# Kernel 2: fused RelDecoder layer (per batch element)
# ---------------------------------------------------------------------------
def _rel_decoder_kernel(h_ref, r_ref, kmask_ref, rwb_ref, rrb_ref,
                        wqkv_ref, wr_ref, wo_ref,
                        ln1_g_ref, ln1_b_ref,
                        w1_ref, b1_ref, w2_ref, b2_ref,
                        ln2_g_ref, ln2_b_ref,
                        out_ref, *, n_head, d_head, scale):
    cdt = wqkv_ref.dtype                       # matmul operand dtype (f32 or bf16)
    h = h_ref[0]                               # (Q, D)
    r = r_ref[0]                               # (R = 2Q, D)
    kmask = kmask_ref[0]                       # (1, Q) f32: 1 = real token, 0 = pad
    q_len = h.shape[0]
    hd = n_head * d_head

    # qkv / r projections: full-K MXU matmuls, f32 accumulation.
    w_heads = jnp.dot(h, wqkv_ref[...], preferred_element_type=jnp.float32)   # (Q, 3*HD)
    r_k = jnp.dot(r, wr_ref[...], preferred_element_type=jnp.float32)         # (R, HD)

    w_q = w_heads[:, :hd]                                                     # (Q, HD) f32
    w_k = w_heads[:, hd:2 * hd].astype(cdt)
    w_v = w_heads[:, 2 * hd:].astype(cdt)
    r_k = r_k.astype(cdt)

    # Fold 1/sqrt(d_head) into the queries; bias broadcasts hoisted out of the head loop.
    q_rw = ((w_q + rwb_ref[...]) * scale).astype(cdt)                         # (Q, HD)
    q_rr = ((w_q + rrb_ref[...]) * scale).astype(cdt)

    key_valid = kmask > 0.5                                                   # (1, Q) bool

    dn = (((1,), (1,)), ((), ()))              # contract the d_head axis of both operands
    av_parts = []
    for n in range(n_head):
        lo, hi = n * d_head, (n + 1) * d_head
        ac = lax.dot_general(q_rw[:, lo:hi], w_k[:, lo:hi], dn,
                             preferred_element_type=jnp.float32)              # (Q, Q)
        bd = lax.dot_general(q_rr[:, lo:hi], r_k[:, lo:hi], dn,
                             preferred_element_type=jnp.float32)              # (Q, 2Q)
        score = ac + _rel_shift_band(bd, q_len)                               # (Q, Q)
        score = jnp.where(key_valid, score, MASK_FILL)                        # key-padding mask
        score = score - jnp.max(score, axis=-1, keepdims=True)
        p = jnp.exp(score)
        p = p / jnp.sum(p, axis=-1, keepdims=True)     # exact divide (parity w/ reference)
        av_parts.append(jnp.dot(p.astype(cdt), w_v[:, lo:hi],
                                preferred_element_type=jnp.float32))          # (Q, Dh)

    # Single full-K output projection: (Q, HD) @ (HD, D).
    av = jnp.concatenate(av_parts, axis=-1).astype(cdt)
    attn_out = jnp.dot(av, wo_ref[...], preferred_element_type=jnp.float32)   # (Q, D)

    # residual + post-norm (f32)
    x = _layer_norm(h.astype(jnp.float32) + attn_out, ln1_g_ref[...], ln1_b_ref[...])

    # position-wise FF (post-norm) + residual
    mid = jnp.maximum(
        jnp.dot(x.astype(cdt), w1_ref[...], preferred_element_type=jnp.float32)
        + b1_ref[...], 0.0)
    ffo = jnp.dot(mid.astype(cdt), w2_ref[...], preferred_element_type=jnp.float32) + b2_ref[...]
    out_ref[0] = _layer_norm(x + ffo, ln2_g_ref[...], ln2_b_ref[...]).astype(out_ref.dtype)


def _full2d(shape):
    return pl.BlockSpec(shape, lambda b: (0, 0))


def rel_decoder_layer(h, r, kmask, r_w_bias, r_r_bias, p, *,
                      n_head, d_head, compute_dtype=jnp.float32):
    """One RelDecoder layer.  h: (B, T, D) f32, r: (B, 2T, D) f32, kmask: (B, 1, T) f32."""
    B, T, D = h.shape
    R = r.shape[1]
    assert R == 2 * T, "relative embedding length must be 2*qlen (as in TransformerXL.forward)"
    hd = n_head * d_head
    d_inner = p["w1"].shape[1]
    scale = 1.0 / d_head ** 0.5
    cdt = compute_dtype

    rwb = r_w_bias.reshape(1, hd).astype(jnp.float32)
    rrb = r_r_bias.reshape(1, hd).astype(jnp.float32)

    kern = functools.partial(_rel_decoder_kernel, n_head=n_head, d_head=d_head, scale=scale)
    return pl.pallas_call(
        kern,
        grid=(B,),
        in_specs=[
            pl.BlockSpec((1, T, D), lambda b: (b, 0, 0)),      # h
            pl.BlockSpec((1, R, D), lambda b: (b, 0, 0)),      # r (pos embed)
            pl.BlockSpec((1, 1, T), lambda b: (b, 0, 0)),      # key mask
            _full2d((1, hd)), _full2d((1, hd)),                # r_w_bias, r_r_bias (rows)
            _full2d((D, 3 * hd)), _full2d((D, hd)), _full2d((hd, D)),   # wqkv, wr, wo
            _full2d((1, D)), _full2d((1, D)),                  # ln1 gamma/beta
            _full2d((D, d_inner)), _full2d((1, d_inner)),      # w1, b1
            _full2d((d_inner, D)), _full2d((1, D)),            # w2, b2
            _full2d((1, D)), _full2d((1, D)),                  # ln2 gamma/beta
        ],
        out_specs=pl.BlockSpec((1, T, D), lambda b: (b, 0, 0)),
        out_shape=jax.ShapeDtypeStruct((B, T, D), jnp.float32),
        compiler_params=pltpu.CompilerParams(
            dimension_semantics=("parallel",),
            vmem_limit_bytes=64 * 1024 * 1024),
    )(h.astype(cdt), r.astype(cdt), kmask,
      rwb, rrb,
      p["wqkv"].astype(cdt), p["wr"].astype(cdt), p["wo"].astype(cdt),
      p["ln1_g"], p["ln1_b"],
      p["w1"].astype(cdt), p["b1"], p["w2"].astype(cdt), p["b2"],
      p["ln2_g"], p["ln2_b"])


# ---------------------------------------------------------------------------
# Full TransformerXL forward (eval mode)
# ---------------------------------------------------------------------------
def transformer_xl_forward(h, params, *, n_head, d_head, n_layer,
                           seq_mask=None, batch_first=True,
                           compute_dtype=jnp.float32):
    """Mirrors TransformerXL.forward (eval mode).

    h: (B, T, d_model) if batch_first else (T, B, d_model)
    seq_mask: optional (B, T) (or (T, B) if not batch_first); truthy = real token.
    Returns (h_out, hids); hids entries are (B, T, d_model).
    """
    if not batch_first:
        h = jnp.transpose(h, (1, 0, 2))
        if seq_mask is not None:
            seq_mask = jnp.transpose(seq_mask, (1, 0))
    h = h.astype(jnp.float32)
    B, T, D = h.shape

    # ---- PositionalEmbedding (host glue: constant sin/cos table + fw/bw batch split) ----
    inv_freq = 1.0 / (10000.0 ** (jnp.arange(0.0, D, 2.0, dtype=jnp.float32) / D))

    def pos_emb(pos_seq):
        si = jnp.outer(pos_seq, inv_freq)
        return jnp.concatenate([jnp.sin(si), jnp.cos(si)], axis=-1)           # (2T, D)

    fw = pos_emb(jnp.arange(T, -T, -1.0, dtype=jnp.float32))
    bw = pos_emb(jnp.arange(-T, T, 1.0, dtype=jnp.float32))
    n_fw = B // 2
    pos = jnp.concatenate(
        [jnp.broadcast_to(fw[None], (n_fw, 2 * T, D)),
         jnp.broadcast_to(bw[None], (B - n_fw, 2 * T, D))], axis=0)           # (B, 2T, D)

    # key-padding mask (module: att_mask = ~seq_mask, masked_fill(-1e9))
    if seq_mask is None:
        kmask = jnp.ones((B, 1, T), jnp.float32)
    else:
        kmask = seq_mask.astype(jnp.float32).reshape(B, 1, T)

    # ---- initial LayerNorm (Pallas), Dropout = identity in eval ----
    h_ln = layer_norm_pallas(h, params["ln0_g"], params["ln0_b"])
    hids = [h_ln]
    out = h_ln
    for i in range(n_layer):
        out = rel_decoder_layer(out, pos, kmask,
                                params["r_w_bias"], params["r_r_bias"],
                                params["layers"][i],
                                n_head=n_head, d_head=d_head,
                                compute_dtype=compute_dtype)
        hids.append(out)

    h_out = out if batch_first else jnp.transpose(out, (1, 0, 2))
    return h_out, hids


# ---------------------------------------------------------------------------
# Pure-JAX reference (mirrors the PyTorch forward exactly, eval mode, f32)
# ---------------------------------------------------------------------------
def _ln_ref(x, g, b):
    m = x.mean(-1, keepdims=True)
    v = ((x - m) ** 2).mean(-1, keepdims=True)
    return (x - m) / jnp.sqrt(v + LAYER_NORM_EPS) * g + b


def _mm_ref(a, w):
    return jnp.einsum('...i,ij->...j', a, w, precision="highest")


def _rel_decoder_ref(h, r, r_w_bias, r_r_bias, p, att_mask, *, n_head, d_head):
    qlen, bsz, d_model = h.shape
    rlen = r.shape[0]
    scale = 1.0 / d_head ** 0.5

    w_heads = _mm_ref(h, p["wqkv"])
    w_q, w_k, w_v = jnp.split(w_heads, 3, axis=-1)
    r_k = _mm_ref(r, p["wr"])
    w_q = w_q.reshape(qlen, bsz, n_head, d_head)
    w_k = w_k.reshape(qlen, bsz, n_head, d_head)
    w_v = w_v.reshape(qlen, bsz, n_head, d_head)
    r_k = r_k.reshape(rlen, bsz, n_head, d_head)

    AC = jnp.einsum('ibnd,jbnd->ijbn', w_q + r_w_bias, w_k, precision="highest")
    BD = jnp.einsum('ibnd,jbnd->ijbn', w_q + r_r_bias, r_k, precision="highest")
    BD = BD.reshape(rlen, qlen, bsz, n_head)[1:].reshape(qlen, rlen - 1, bsz, n_head)[:, :qlen]

    score = (AC + BD) * scale
    if att_mask is not None:
        score = jnp.where(att_mask[None, :, :, None], MASK_FILL, score)
    prob = jax.nn.softmax(score, axis=1)
    attn_vec = jnp.einsum('ijbn,jbnd->ibnd', prob, w_v,
                          precision="highest").reshape(qlen, bsz, n_head * d_head)
    attn_out = _mm_ref(attn_vec, p["wo"])

    x = _ln_ref(h + attn_out, p["ln1_g"][0], p["ln1_b"][0])
    ff = _mm_ref(jax.nn.relu(_mm_ref(x, p["w1"]) + p["b1"][0]), p["w2"]) + p["b2"][0]
    return _ln_ref(x + ff, p["ln2_g"][0], p["ln2_b"][0])


def transformer_xl_ref(h_btd, params, *, n_head, d_head, n_layer, seq_mask=None):
    h = jnp.transpose(h_btd, (1, 0, 2)).astype(jnp.float32)   # (T, B, D)
    T, B, D = h.shape
    att_mask = None if seq_mask is None else ~(seq_mask.astype(bool).T)       # (T, B), True = pad

    inv_freq = 1.0 / (10000.0 ** (jnp.arange(0.0, D, 2.0, dtype=jnp.float32) / D))

    def pos_emb(seq, bsz):
        si = jnp.outer(seq, inv_freq)
        pe = jnp.concatenate([jnp.sin(si), jnp.cos(si)], -1)
        return jnp.broadcast_to(pe[:, None, :], (pe.shape[0], bsz, D))

    fw = pos_emb(jnp.arange(T, -T, -1.0, dtype=jnp.float32), B // 2)
    bw = pos_emb(jnp.arange(-T, T, 1.0, dtype=jnp.float32), B - B // 2)
    pos = jnp.concatenate([fw, bw], axis=1)                                   # (2T, B, D)

    h = _ln_ref(h, params["ln0_g"][0], params["ln0_b"][0])
    hids = [jnp.transpose(h, (1, 0, 2))]
    out = h
    for i in range(n_layer):
        out = _rel_decoder_ref(out, pos, params["r_w_bias"], params["r_r_bias"],
                               params["layers"][i], att_mask,
                               n_head=n_head, d_head=d_head)
        hids.append(jnp.transpose(out, (1, 0, 2)))
    return jnp.transpose(out, (1, 0, 2)), hids


# ---------------------------------------------------------------------------
if __name__ == "__main__":
    n_head, d_head, d_model, d_inner = 2, 16, 32, 64
    n_layer, T, B = 2, 8, 2

    key = jax.random.PRNGKey(0)
    keys = iter(jax.random.split(key, 64))

    def init(shape, s=0.1):
        return (s * jax.random.normal(next(keys), shape)).astype(jnp.float32)

    def layer_params():
        return {
            "wqkv": init((d_model, 3 * n_head * d_head)),
            "wr":   init((d_model, n_head * d_head)),
            "wo":   init((n_head * d_head, d_model)),
            "w1":   init((d_model, d_inner)),
            "b1":   init((1, d_inner)),
            "w2":   init((d_inner, d_model)),
            "b2":   init((1, d_model)),
            "ln1_g": 1.0 + init((1, d_model)),
            "ln1_b": init((1, d_model)),
            "ln2_g": 1.0 + init((1, d_model)),
            "ln2_b": init((1, d_model)),
        }

    params = {
        "layers": [layer_params() for _ in range(n_layer)],
        "r_w_bias": init((n_head, d_head)),
        "r_r_bias": init((n_head, d_head)),
        "ln0_g": 1.0 + init((1, d_model)),
        "ln0_b": init((1, d_model)),
    }

    h = jax.random.normal(next(keys), (B, T, d_model), dtype=jnp.float32)
    seq_mask = jnp.array([[1, 1, 1, 1, 1, 1, 0, 0],
                          [1, 1, 1, 1, 1, 1, 1, 1]], dtype=jnp.int32)   # (B, T), 0 = padding

    # ---- f32 path, no mask ----
    out, hids = transformer_xl_forward(h, params, n_head=n_head, d_head=d_head,
                                       n_layer=n_layer, compute_dtype=jnp.float32)
    out = jax.block_until_ready(out)
    ref_out, ref_hids = transformer_xl_ref(h, params, n_head=n_head, d_head=d_head,
                                           n_layer=n_layer)
    assert out.shape == (B, T, d_model)
    err = jnp.max(jnp.abs(out - ref_out))
    assert jnp.allclose(out, ref_out, atol=5e-3, rtol=5e-3), f"f32 max abs err {err}"
    for a, b_ in zip(hids, ref_hids):
        assert jnp.allclose(a, b_, atol=5e-3, rtol=5e-3)

    # ---- f32 path, with key-padding mask ----
    out_m, _ = transformer_xl_forward(h, params, n_head=n_head, d_head=d_head,
                                      n_layer=n_layer, seq_mask=seq_mask,
                                      compute_dtype=jnp.float32)
    out_m = jax.block_until_ready(out_m)
    ref_m, _ = transformer_xl_ref(h, params, n_head=n_head, d_head=d_head,
                                  n_layer=n_layer, seq_mask=seq_mask)
    err_m = jnp.max(jnp.abs(out_m - ref_m))
    assert jnp.allclose(out_m, ref_m, atol=5e-3, rtol=5e-3), f"masked max abs err {err_m}"

    # ---- bf16 matmul path (f32 accumulation; looser tolerance) ----
    out_bf, _ = transformer_xl_forward(h, params, n_head=n_head, d_head=d_head,
                                       n_layer=n_layer, compute_dtype=jnp.bfloat16)
    out_bf = jax.block_until_ready(out_bf)
    err_bf = jnp.max(jnp.abs(out_bf - ref_out))
    assert jnp.allclose(out_bf, ref_out, atol=1e-1, rtol=1e-1), f"bf16 max abs err {err_bf}"

    print("KERNEL_OK")
</pallas_src>

<mosaic_0001>
module attributes {stable_mosaic.version = 11 : i64} {
  func.func @_layer_norm_kernel(%arg0: i32, %arg1: memref<1x8x32xf32, #tpu.memory_space<vmem>>, %arg2: memref<1x32xf32, #tpu.memory_space<vmem>>, %arg3: memref<1x32xf32, #tpu.memory_space<vmem>>, %arg4: memref<1x8x32xf32, #tpu.memory_space<vmem>>) attributes {dimension_semantics = [#tpu.dimension_semantics<parallel>], iteration_bounds = array<i64: 2>, scalar_prefetch = 0 : i64, scratch_operands = 0 : i64, tpu.core_type = #tpu.core_type<tc>, window_params = [{transform_indices = @transform_0, window_bounds = array<i64: 1, 8, 32>}, {pipeline_mode = #tpu.pipeline_mode<synchronous>, transform_indices = @transform_1, window_bounds = array<i64: 1, 32>}, {pipeline_mode = #tpu.pipeline_mode<synchronous>, transform_indices = @transform_2, window_bounds = array<i64: 1, 32>}, {transform_indices = @transform_3, window_bounds = array<i64: 1, 8, 32>}]} {
    %c0 = arith.constant 0 : index
    %c0_0 = arith.constant 0 : index
    %c0_1 = arith.constant 0 : index
    %0 = vector.load %arg1[%c0, %c0_0, %c0_1] : memref<1x8x32xf32, #tpu.memory_space<vmem>>, vector<1x8x32xf32>
    %1 = vector.shape_cast %0 : vector<1x8x32xf32> to vector<8x32xf32>
    %c0_2 = arith.constant 0 : index
    %c0_3 = arith.constant 0 : index
    %2 = vector.load %arg2[%c0_2, %c0_3] : memref<1x32xf32, #tpu.memory_space<vmem>>, vector<1x32xf32>
    %c0_4 = arith.constant 0 : index
    %c0_5 = arith.constant 0 : index
    %3 = vector.load %arg3[%c0_4, %c0_5] : memref<1x32xf32, #tpu.memory_space<vmem>>, vector<1x32xf32>
    %cst = arith.constant dense<0.000000e+00> : vector<8xf32>
    %4 = vector.multi_reduction <add>, %1, %cst [1] : vector<8x32xf32> to vector<8xf32>
    %5 = vector.shape_cast %4 : vector<8xf32> to vector<8x1xf32>
    %cst_6 = arith.constant 3.200000e+01 : f32
    %6 = vector.broadcast %cst_6 : f32 to vector<8x1xf32>
    %7 = arith.divf %5, %6 : vector<8x1xf32>
    %8 = vector.broadcast %7 : vector<8x1xf32> to vector<8x32xf32>
    %9 = arith.subf %1, %8 : vector<8x32xf32>
    %10 = arith.mulf %9, %9 : vector<8x32xf32>
    %cst_7 = arith.constant dense<0.000000e+00> : vector<8xf32>
    %11 = vector.multi_reduction <add>, %10, %cst_7 [1] : vector<8x32xf32> to vector<8xf32>
    %12 = vector.shape_cast %11 : vector<8xf32> to vector<8x1xf32>
    %cst_8 = arith.constant 3.200000e+01 : f32
    %13 = vector.broadcast %cst_8 : f32 to vector<8x1xf32>
    %14 = arith.divf %12, %13 : vector<8x1xf32>
    %15 = vector.broadcast %7 : vector<8x1xf32> to vector<8x32xf32>
    %16 = arith.subf %1, %15 : vector<8x32xf32>
    %cst_9 = arith.constant 9.99999997E-7 : f32
    %17 = vector.broadcast %cst_9 : f32 to vector<8x1xf32>
    %18 = arith.addf %14, %17 : vector<8x1xf32>
    %19 = math.rsqrt %18 : vector<8x1xf32>
    %20 = vector.broadcast %19 : vector<8x1xf32> to vector<8x32xf32>
    %21 = arith.mulf %16, %20 : vector<8x32xf32>
    %22 = vector.broadcast %2 : vector<1x32xf32> to vector<8x32xf32>
    %23 = arith.mulf %21, %22 : vector<8x32xf32>
    %24 = vector.broadcast %3 : vector<1x32xf32> to vector<8x32xf32>
    %25 = arith.addf %23, %24 : vector<8x32xf32>
    %c0_10 = arith.constant 0 : index
    %c0_11 = arith.constant 0 : index
    %c0_12 = arith.constant 0 : index
    %26 = vector.load %arg4[%c0_10, %c0_11, %c0_12] : memref<1x8x32xf32, #tpu.memory_space<vmem>>, vector<1x8x32xf32>
    %27 = vector.shape_cast %26 : vector<1x8x32xf32> to vector<8x32xf32>
    %28 = vector.shape_cast %25 : vector<8x32xf32> to vector<1x8x32xf32>
    tpu.vector_store %arg4[%c0_10, %c0_11, %c0_12], %28 {strides = array<i32>} : memref<1x8x32xf32, #tpu.memory_space<vmem>>, vector<1x8x32xf32>,
    return
  }
  func.func @transform_0(%arg0: i32) -> (i32, i32, i32) {
    %c0_i32 = arith.constant 0 : i32
    %c0_i32_0 = arith.constant 0 : i32
    %c0_i32_1 = arith.constant 0 : i32
    return %arg0, %c0_i32, %c0_i32_0 : i32, i32, i32
  }
  func.func @transform_1(%arg0: i32) -> (i32, i32) {
    %c0_i32 = arith.constant 0 : i32
    %c0_i32_0 = arith.constant 0 : i32
    %c0_i32_1 = arith.constant 0 : i32
    return %c0_i32, %c0_i32_0 : i32, i32
  }
  func.func @transform_2(%arg0: i32) -> (i32, i32) {
    %c0_i32 = arith.constant 0 : i32
    %c0_i32_0 = arith.constant 0 : i32
    %c0_i32_1 = arith.constant 0 : i32
    return %c0_i32, %c0_i32_0 : i32, i32
  }
  func.func @transform_3(%arg0: i32) -> (i32, i32, i32) {
    %c0_i32 = arith.constant 0 : i32
    %c0_i32_0 = arith.constant 0 : i32
    %c0_i32_1 = arith.constant 0 : i32
    return %arg0, %c0_i32, %c0_i32_0 : i32, i32, i32
  }
}

</mosaic_0001>

<llo_original>
// kernel: tpu_custom_call.1
$region0: #{tpu_custom_call.1}
  #allocation0 [shape = 'u32[]', space=smem, size = 0x4, offset = 0x4, fixed_abs, tag = 'smem constant byte address 0x4 - core index']
  #allocation1 [shape = 'u32[144,128]{1,0:T(1,128)}', space=vmem, size = 0x12000, scoped, tag = 'internal scratch']
  %s0 = inlined_call_operand.hbm [shape: f32[2,8,32], index: 0, kind: input, shape index: {}]
  %s1 = inlined_call_operand.vmem [shape: f32[1,32], index: 1, kind: input, shape index: {}]
  %s2 = inlined_call_operand.vmem [shape: f32[1,32], index: 2, kind: input, shape index: {}]
  %s3 = inlined_call_operand.hbm [shape: f32[2,8,32], index: 3, kind: output, shape index: {}]
  %s4 = sld [smem:[#allocation0]]
  $region49: #{tpu_custom_call.1} parent=0
    _
  %s6 = ssub.s32 1, %s4
  %s7 = scalar_select 0, %s6, %s4
  $region1: #{tpu_custom_call.1} parent=0
    #allocation2 [shape = 'u8[8192]{0}', space=vmem, size = 0x2000, scoped, tag = 'input window, operand 0']
    #allocation3 [shape = 's32[2]{0}', space=sflag, size = 0x8, scoped, tag = 'scoped memory for tpu_custom_call.1']
    #allocation4 [shape = 's32[2]{0}', space=sflag, size = 0x8, scoped, tag = 'scoped memory for tpu_custom_call.1']
    #allocation5 [shape = 'u8[8192]{0}', space=vmem, size = 0x2000, scoped, tag = 'output window, operand 0']
    %8 = vsyncpa [#allocation3], 0
    %s9 = scalar_lea.sflag [#allocation3], 1
    %10 = vsyncpa %s9, 0
    %11 = vsyncpa [#allocation4], 0
    %s12 = scalar_lea.sflag [#allocation4], 1
    %13 = vsyncpa %s12, 0
    loop: start=0, step=1, limit=4
    $region2: #{tpu_custom_call.1} parent=1 // loop_pre_header
      _
    $region3: #{tpu_custom_call.1} parent=1 // loop_header
      %s15 = sphi 0, %s19
      %p16 = scmp.ge.s32.totalorder %s15, 4
      %s25 = sphi 0, %s27
      %s28 = sphi 0, %s25
      %s29 = sphi 0, %s28
      %s45 = sphi 0, %s29
      %s49 = sphi 0, %s49
      %s51 = sphi 0, %s49
      %s52 = sphi 0, %s51
      %s66 = sphi 0, %s52
      %s70 = sphi 0, %s70
      %s72 = sphi 0, %s70
      %s73 = sphi 0, %s72
      %s87 = sphi 0, %s73
      %s93 = sphi 0, %s95
      %s96 = sphi 0, %s93
      %s97 = sphi 0, %s96
      %s113 = sphi 0, %s97
    $region4: #{tpu_custom_call.1} parent=1 // loop_header_branch
      %18 = sbr.rel (%p16) target = $region8
    $region5: #{tpu_custom_call.1} parent=1 // loop_body
      %s20 = ssub.s32 %s15, 1
      %s21 = ssub.s32 %s15, 2
      %s22 = sadd.s32 %s15, 1
      %s23 = ssub.s32 %s15, %s22
      %p24 = scmp.eq.s32.totalorder %s23, 0
      %s26 = sadd.s32 %s25, 1
      %s27 = scalar_select %p24, %s25, %s26
      %p30 = pneg %p24
      %p31 = scmp.eq.s32.totalorder %s15, 1
      %p32 = por %p30, %p31
      %p33 = scmp.ne.s32.totalorder %s25, %s28
      %p34 = scmp.eq.s32.totalorder %s15, 0
      %p35 = por %p33, %p34
      %p36 = scmp.ne.s32.totalorder %s25, %s28
      %p37 = scmp.eq.s32.totalorder %s20, 1
      %p38 = por %p36, %p37
      %p39 = scmp.ne.s32.totalorder %s28, %s29
      %p40 = scmp.eq.s32.totalorder %s20, 0
      %p41 = por %p39, %p40
      %p42 = scmp.ne.s32.totalorder %s28, %s29
      %p43 = scmp.eq.s32.totalorder %s21, 1
      %p44 = por %p42, %p43
      %p46 = scmp.ne.s32.totalorder %s29, %s45
      %p47 = scmp.eq.s32.totalorder %s21, 0
      %p48 = por %p46, %p47
      %s50 = sadd.s32 %s49, 1
      %p53 = scmp.eq.s32.totalorder %s15, 1
      %p54 = scmp.ne.s32.totalorder %s49, %s51
      %p55 = scmp.eq.s32.totalorder %s15, 0
      %p56 = por %p54, %p55
      %p57 = scmp.ne.s32.totalorder %s49, %s51
      %p58 = scmp.eq.s32.totalorder %s20, 1
      %p59 = por %p57, %p58
      %p60 = scmp.ne.s32.totalorder %s51, %s52
      %p61 = scmp.eq.s32.totalorder %s20, 0
      %p62 = por %p60, %p61
      %p63 = scmp.ne.s32.totalorder %s51, %s52
      %p64 = scmp.eq.s32.totalorder %s21, 1
      %p65 = por %p63, %p64
      %p67 = scmp.ne.s32.totalorder %s52, %s66
      %p68 = scmp.eq.s32.totalorder %s21, 0
      %p69 = por %p67, %p68
      %s71 = sadd.s32 %s70, 1
      %p74 = scmp.eq.s32.totalorder %s15, 1
      %p75 = scmp.ne.s32.totalorder %s70, %s72
      %p76 = scmp.eq.s32.totalorder %s15, 0
      %p77 = por %p75, %p76
      %p78 = scmp.ne.s32.totalorder %s70, %s72
      %p79 = scmp.eq.s32.totalorder %s20, 1
      %p80 = por %p78, %p79
      %p81 = scmp.ne.s32.totalorder %s72, %s73
      %p82 = scmp.eq.s32.totalorder %s20, 0
      %p83 = por %p81, %p82
      %p84 = scmp.ne.s32.totalorder %s72, %s73
      %p85 = scmp.eq.s32.totalorder %s21, 1
      %p86 = por %p84, %p85
      %p88 = scmp.ne.s32.totalorder %s73, %s87
      %p89 = scmp.eq.s32.totalorder %s21, 0
      %p90 = por %p88, %p89
      %s91 = ssub.s32 %s15, %s22
      %p92 = scmp.eq.s32.totalorder %s91, 0
      %s94 = sadd.s32 %s93, 1
      %s95 = scalar_select %p92, %s93, %s94
      %p98 = pneg %p92
      %p99 = scmp.eq.s32.totalorder %s15, 1
      %p100 = por %p98, %p99
      %p101 = scmp.ne.s32.totalorder %s93, %s96
      %p102 = scmp.eq.s32.totalorder %s15, 0
      %p103 = por %p101, %p102
      %p104 = scmp.ne.s32.totalorder %s93, %s96
      %p105 = scmp.eq.s32.totalorder %s20, 1
      %p106 = por %p104, %p105
      %p107 = scmp.ne.s32.totalorder %s96, %s97
      %p108 = scmp.eq.s32.totalorder %s20, 0
      %p109 = por %p107, %p108
      %p110 = scmp.ne.s32.totalorder %s96, %s97
      %p111 = scmp.eq.s32.totalorder %s21, 1
      %p112 = por %p110, %p111
      %p114 = scmp.ne.s32.totalorder %s97, %s113
      %p115 = scmp.eq.s32.totalorder %s21, 0
      %p116 = por %p114, %p115
      %p117 = scmp.le.s32.totalorder 1, %s15
      %p118 = scmp.lt.s32.totalorder %s15, 3
      %p119 = pnand %p117, %p118
      %p120 = pneg %p119
      // Predicated region
      $region9: #{tpu_custom_call.1} parent=5 // pred_check
        _
      $region10: #{tpu_custom_call.1} parent=5 // pred_check_branch
        %122 = sbr.rel (%p119) target = $region12
      $region11: #{tpu_custom_call.1} parent=5 // pred_region
        %s123 = ssub.s32 %s15, 1
        // Predicated region
        $region13: #{tpu_custom_call.1} parent=11 // pred_check
          %p124 = pneg %p62
        $region14: #{tpu_custom_call.1} parent=11 // pred_check_branch
          %126 = sbr.rel (%p124) target = $region16
        $region15: #{tpu_custom_call.1} parent=11 // pred_region
          _
        $region16: #{tpu_custom_call.1} parent=11 // pred_fallthru
          _
        // Predicated region
        $region17: #{tpu_custom_call.1} parent=11 // pred_check
          %p127 = pneg %p83
        $region18: #{tpu_custom_call.1} parent=11 // pred_check_branch
          %129 = sbr.rel (%p127) target = $region20
        $region19: #{tpu_custom_call.1} parent=11 // pred_region
          _
        $region20: #{tpu_custom_call.1} parent=11 // pred_fallthru
          _
      $region12: #{tpu_custom_call.1} parent=5 // pred_fallthru
        _
      %p130 = scmp.lt.s32.totalorder %s15, 2
      // Predicated region
      $region21: #{tpu_custom_call.1} parent=5 // pred_check
        %p131 = pneg %p130
      $region22: #{tpu_custom_call.1} parent=5 // pred_check_branch
        %133 = sbr.rel (%p131) target = $region24
      $region23: #{tpu_custom_call.1} parent=5 // pred_region
        // Predicated region
        $region25: #{tpu_custom_call.1} parent=23 // pred_check
          %p134 = pneg %p35
        $region26: #{tpu_custom_call.1} parent=23 // pred_check_branch
          %136 = sbr.rel (%p134) target = $region28
        $region27: #{tpu_custom_call.1} parent=23 // pred_region
          %s137 = sand.u32 %s25, 1
          %s138 = scalar_lea.sflag [#allocation3], %s137
          %s139 = sand.u32 %s25, 1
          %s140 = smul.addr %s139, 8
          %s141 = scalar_lea.vmem [#allocation2], %s140
          %s143 = ssub.s32 128, 128
          %144 = vsyncadd %s138, %s143
          %s145 = smul.addr %s15, 128
          %s146 = scalar_lea.hbm %s0, %s145
          %s148 = sshll.u32 %s141, 4
          %s149 = int_to_ptr.vmem [resolvable:$true] %s148
          %151 = dma.hbm_to_vmem [thread:$0]  %s146, 128, %s149, %s138
        $region28: #{tpu_custom_call.1} parent=23 // pred_fallthru
          _
      $region24: #{tpu_custom_call.1} parent=5 // pred_fallthru
        _
      %p152 = scmp.le.s32.totalorder 1, %s15
      %p153 = scmp.lt.s32.totalorder %s15, 3
      %p154 = pnand %p152, %p153
      %p155 = pneg %p154
      // Predicated region
      $region29: #{tpu_custom_call.1} parent=5 // pred_check
        _
      $region30: #{tpu_custom_call.1} parent=5 // pred_check_branch
        %157 = sbr.rel (%p154) target = $region32
      $region31: #{tpu_custom_call.1} parent=5 // pred_region
        %s158 = ssub.s32 %s15, 1
        %s159 = sand.u32 %s28, 1
        %s160 = scalar_lea.sflag [#allocation3], %s159
        %s161 = sand.u32 %s28, 1
        %s162 = smul.addr %s161, 8
        %s163 = scalar_lea.vmem [#allocation2], %s162
        // Predicated region
        $region33: #{tpu_custom_call.1} parent=31 // pred_check
          %p164 = pneg %p41
        $region34: #{tpu_custom_call.1} parent=31 // pred_check_branch
          %166 = sbr.rel (%p164) target = $region36
        $region35: #{tpu_custom_call.1} parent=31 // pred_region
          %167 = dma.done %s160, 128
        $region36: #{tpu_custom_call.1} parent=31 // pred_fallthru
          _
        %s168 = sand.u32 %s28, 1
        %s169 = scalar_lea.sflag [#allocation3], %s168
        %s170 = sand.u32 %s28, 1
        %s171 = smul.addr %s170, 8
        %s172 = scalar_lea.vmem [#allocation2], %s171
        %p173 = pneg %p41
        %p174 = pneg %p38
        %p175 = pneg %p62
        %p176 = pneg %p59
        %p177 = pneg %p83
        %p178 = pneg %p80
        %p179 = pneg %p109
        %p180 = pneg %p106
        %s181 = sand.u32 %s96, 1
        %s182 = scalar_lea.sflag [#allocation4], %s181
        %s183 = sand.u32 %s96, 1
        %s184 = smul.addr %s183, 8
        %s185 = scalar_lea.vmem [#allocation5], %s184
        %v186 = vld [vmem:[%s163] sm:$0xff]
        %v187 = vld [vmem:[%s1] sm:$0x1]
        %v188 = vld [vmem:[%s2] sm:$0x1]
        %vm189 = vcmask 261120
        %v190 = vsel %vm189, %v186, 0.0
        %191 = vadd.xlane.f32.xlu0 %v190
        %v192 = vpop.xlane.xlu0 %191
        %v193 = vrcp.pop 32.0
        %v194 = vmul.f32 %v192, %v193
        %v195 = vsub.f32 %v186, %v194
        %v196 = vmul.f32 %v195, %v195
        %v197 = vsel %vm189, %v196, 0.0
        %198 = vadd.xlane.f32.xlu0 %v197
        %v199 = vpop.xlane.xlu0 %198
        %v200 = vmul.f32 %v199, %v193
        %v201 = vadd.f32 %v200, 1e-06
        %v202 = vrsqrt.pop %v201
        %v203 = vmul.f32 %v195, %v202
        %v205 = vlaneseq
        %v206 = vshrl.u32 %v205, 7
        %v207 = vsub.s32 0, %v206
        %v208 = vrot.slane %v187, %v207
        %v210 = vmul.f32 %v203, %v208
        %v212 = vlaneseq
        %v213 = vshrl.u32 %v212, 7
        %v214 = vsub.s32 0, %v213
        %v215 = vrot.slane %v188, %v214
        %v217 = vadd.f32 %v210, %v215
        %218 = vst.msk [vmem:[%s185] sm:$0xff] %vm189, %v217
        %s219 = sand.u32 %s96, 1
        %s220 = scalar_lea.sflag [#allocation4], %s219
        %s221 = sand.u32 %s96, 1
        %s222 = smul.addr %s221, 8
        %s223 = scalar_lea.vmem [#allocation5], %s222
        // Predicated region
        $region37: #{tpu_custom_call.1} parent=31 // pred_check
          %p224 = pneg %p106
        $region38: #{tpu_custom_call.1} parent=31 // pred_check_branch
          %226 = sbr.rel (%p224) target = $region40
        $region39: #{tpu_custom_call.1} parent=31 // pred_region
          %s228 = ssub.s32 128, 128
          %229 = vsyncadd %s220, %s228
          %s230 = smul.addr %s20, 128
          %s231 = scalar_lea.hbm %s3, %s230
          %s233 = sshll.u32 %s223, 4
          %s234 = int_to_ptr.vmem [resolvable:$true] %s233
          %236 = dma.vmem_to_hbm [thread:$0]  %s234, 128, %s231, %s220
        $region40: #{tpu_custom_call.1} parent=31 // pred_fallthru
          _
      $region32: #{tpu_custom_call.1} parent=5 // pred_fallthru
        _
      %p237 = scmp.le.s32.totalorder 2, %s15
      // Predicated region
      $region41: #{tpu_custom_call.1} parent=5 // pred_check
        %p238 = pneg %p237
      $region42: #{tpu_custom_call.1} parent=5 // pred_check_branch
        %240 = sbr.rel (%p238) target = $region44
      $region43: #{tpu_custom_call.1} parent=5 // pred_region
        %s241 = ssub.s32 %s15, 2
        // Predicated region
        $region45: #{tpu_custom_call.1} parent=43 // pred_check
          %p242 = pneg %p112
        $region46: #{tpu_custom_call.1} parent=43 // pred_check_branch
          %244 = sbr.rel (%p242) target = $region48
        $region47: #{tpu_custom_call.1} parent=43 // pred_region
          %s245 = sand.u32 %s97, 1
          %s246 = scalar_lea.sflag [#allocation4], %s245
          %s247 = sand.u32 %s97, 1
          %s248 = smul.addr %s247, 8
          %s249 = scalar_lea.vmem [#allocation5], %s248
          %250 = dma.done %s246, 128
        $region48: #{tpu_custom_call.1} parent=43 // pred_fallthru
          _
      $region44: #{tpu_custom_call.1} parent=5 // pred_fallthru
        _
    $region6: #{tpu_custom_call.1} parent=1 // loop_footer
      %s19 = sadd.s32 1, %s15
    $region7: #{tpu_custom_call.1} parent=1 // loop_footer_branch
      %14 = sbr.rel target = $region3
    $region8: #{tpu_custom_call.1} parent=1 // loop_exit
      _
    %251 = vsyncpa [#allocation3], 1
    %s252 = scalar_lea.sflag [#allocation3], 1
    %253 = vsyncpa %s252, 1
    %254 = vsyncpa [#allocation4], 1
    %s255 = scalar_lea.sflag [#allocation4], 1
    %256 = vsyncpa %s255, 1

</llo_original>
